<compile_context>
chip_gen: v7x
topology: tpu7x:2x2x1
jax: 0.10.0
libtpu: 0.0.40
codegen_flags: <defaults>
</compile_context>

<pallas_src>
import jax
import jax.numpy as jnp
from jax import lax
from jax.experimental import pallas as pl
from jax.experimental.pallas import tpu as pltpu

B = 2
C_IN, L_IN = 2, 32
C1, K1, L1 = 4, 10, 23        # conv1: out channels, kernel, out length (32-10+1)
C2, K2, L2 = 2, 5, 19         # conv2: out channels, kernel, out length (23-5+1)
W1V = L_IN + L1               # 55: conv1 output width over the fused-batch lane layout
W2V = L_IN + L2               # 51: conv2 output width over the fused-batch lane layout

# parameter-slab layout: one (16, 128) f32 block, packed once per weight set
P_ROWS, P_LANES = 16, 128
R_W1 = 0                      # rows 0:4,  cols 0:20 -> conv1 weight  [co, k*C_IN + ci]
R_W2 = 4                      # rows 4:6,  cols 0:20 -> conv2 weight  [co, k*C1  + c1]
R_WF = 8                      # rows 8:12, cols 0:19 -> fc weight tiled rows [c0,c0,c1,c1]
C_SCAL = 32                   # scalar column: biases, PReLU slopes, fc bias
R_A1, R_A2, R_BF = 8, 9, 10   # PReLU slope 1 / slope 2 / fc bias (in column C_SCAL)


def comparenet_kernel(x_ref, p_ref, o_ref):
    P = p_ref[...]                                     # (16, 128) parameter slab

    # fused-batch lane layout: column b*L_IN + p
    x_in = jnp.concatenate([x_ref[0], x_ref[1]], axis=1)          # (2, 64)

    w1f = P[R_W1:R_W1 + C1, 0:K1 * C_IN]               # (4, 20)  [co, k*C_IN+ci]
    b1 = P[R_W1:R_W1 + C1, C_SCAL:C_SCAL + 1]          # (4, 1)
    w2p = P[R_W2:R_W2 + C2, 0:K2 * C1]                 # (2, 20)  [co, k*C1+c1]
    b2 = P[R_W2:R_W2 + C2, C_SCAL:C_SCAL + 1]          # (2, 1)
    wf4 = P[R_WF:R_WF + B * C2, 0:L2]                  # (4, 19)  rows [c0, c0, c1, c1]
    a1 = P[R_A1:R_A1 + 1, C_SCAL:C_SCAL + 1]           # (1, 1) PReLU slope 1
    a2 = P[R_A2:R_A2 + 1, C_SCAL:C_SCAL + 1]           # (1, 1) PReLU slope 2
    bf = P[R_BF:R_BF + 1, C_SCAL:C_SCAL + 1]           # (1, 1) fc bias

    # ---- conv1: in-kernel im2col (lane-shifted slices) + ONE MXU dot ----
    # xp row k*C_IN + ci, col c  =  x_in[ci, c + k]
    xp = jnp.concatenate([x_in[:, k:k + W1V] for k in range(K1)], axis=0)   # (20, 55)
    h1 = jnp.dot(w1f, xp, preferred_element_type=jnp.float32) + b1          # (4, 55)
    h1 = jnp.where(h1 >= 0, h1, a1 * h1)               # PReLU (shared scalar)
    # valid h1 columns: 0..22 (batch 0) and 32..54 (batch 1); the rest are discarded.

    # ---- conv2: ONE MXU dot over sublane-stacked shifted h1 slices ----
    # h1p row k*C1 + c1, col c  =  h1[c1, c + k]
    h1p = jnp.concatenate([h1[:, k:k + W2V] for k in range(K2)], axis=0)    # (20, 51)
    h2 = jnp.dot(w2p, h1p, preferred_element_type=jnp.float32) + b2         # (2, 51)
    h2 = jnp.where(h2 >= 0, h2, a2 * h2)               # PReLU (shared scalar)
    # valid h2 columns: 0..18 (batch 0) and 32..50 (batch 1).

    # ---- fc(2*19 -> 1) + sigmoid, both batches fused: one reduction, one store ----
    stacked = jnp.concatenate(
        [h2[0:1, 0:L2], h2[0:1, L_IN:L_IN + L2],
         h2[1:2, 0:L2], h2[1:2, L_IN:L_IN + L2]], axis=0)                   # (4, 19)
    # rows: [b0c0, b1c0, b0c1, b1c1]  <->  wf4 rows [c0, c0, c1, c1]
    s = jnp.sum(stacked * wf4, axis=1, keepdims=True)                       # (4, 1)
    z = s[0:B, :] + s[B:2 * B, :]                                           # (2, 1) = [z0, z1]
    o_ref[...] = jax.nn.sigmoid(z + bf)                                     # single store


def pack_params(params):
    """Pack every weight / bias / scalar into one (16, 128) f32 slab.

    Pure function of the weights -- call ONCE and reuse; it is NOT part of the
    per-forward hot path.
    """
    w1, b1, p1, w2, b2, p2, wf, bf = params
    w1f = jnp.transpose(w1, (0, 2, 1)).reshape(C1, K1 * C_IN)   # [co, k*C_IN+ci]
    w2p = jnp.transpose(w2, (0, 2, 1)).reshape(C2, K2 * C1)     # [co, k*C1 +c1]
    wf2 = wf.reshape(C2, L2)                                    # [co, l]
    wf4 = jnp.repeat(wf2, B, axis=0)                            # rows [c0, c0, c1, c1]

    slab = jnp.zeros((P_ROWS, P_LANES), jnp.float32)
    slab = slab.at[R_W1:R_W1 + C1, 0:K1 * C_IN].set(w1f)
    slab = slab.at[R_W2:R_W2 + C2, 0:K2 * C1].set(w2p)
    slab = slab.at[R_WF:R_WF + B * C2, 0:L2].set(wf4)
    slab = slab.at[R_W1:R_W1 + C1, C_SCAL].set(b1)
    slab = slab.at[R_W2:R_W2 + C2, C_SCAL].set(b2)
    slab = slab.at[R_A1, C_SCAL].set(p1[0])
    slab = slab.at[R_A2, C_SCAL].set(p2[0])
    slab = slab.at[R_BF, C_SCAL].set(bf[0])
    return slab


def comparenet_forward(x, slab):
    """x: raw (B, C_IN, L_IN) input; slab: pre-packed (16, 128) parameter block.

    No per-call wrapper compute at all; gridless single-step pallas_call.
    """
    return pl.pallas_call(
        comparenet_kernel,
        out_shape=jax.ShapeDtypeStruct((B, 1), jnp.float32),
        in_specs=[
            pl.BlockSpec(memory_space=pltpu.MemorySpace.VMEM),   # raw x
            pl.BlockSpec(memory_space=pltpu.MemorySpace.VMEM),   # parameter slab
        ],
        out_specs=pl.BlockSpec(memory_space=pltpu.MemorySpace.VMEM),
    )(x, slab)


def comparenet_reference(x, params):
    """Pure-JAX reference (lax conv) for correctness checking."""
    w1, b1, p1, w2, b2, p2, wf, bf = params
    dn = ('NCH', 'OIH', 'NCH')
    h1 = lax.conv_general_dilated(x, w1, (1,), 'VALID', dimension_numbers=dn)
    h1 = h1 + b1[None, :, None]
    h1 = jnp.where(h1 >= 0, h1, p1[0] * h1)
    h2 = lax.conv_general_dilated(h1, w2, (1,), 'VALID', dimension_numbers=dn)
    h2 = h2 + b2[None, :, None]
    h2 = jnp.where(h2 >= 0, h2, p2[0] * h2)
    flat = h2.reshape(h2.shape[0], -1)                  # (B, 38), channel-major
    z = flat @ wf.T + bf[None, :]                       # (B, 1)
    return jax.nn.sigmoid(z)


def init_params(key):
    k1, k2, k3, k4, k5, k6 = jax.random.split(key, 6)
    w1 = 0.1 * jax.random.normal(k1, (C1, C_IN, K1), jnp.float32)   # conv1.weight
    b1 = 0.1 * jax.random.normal(k2, (C1,), jnp.float32)            # conv1.bias
    p1 = jnp.full((1,), 0.25, jnp.float32)                          # PReLU default init
    w2 = 0.1 * jax.random.normal(k3, (C2, C1, K2), jnp.float32)     # conv2.weight
    b2 = 0.1 * jax.random.normal(k4, (C2,), jnp.float32)            # conv2.bias
    p2 = jnp.full((1,), 0.25, jnp.float32)
    wf = 0.1 * jax.random.normal(k5, (1, C2 * L2), jnp.float32)     # fc1.weight
    bf = 0.1 * jax.random.normal(k6, (1,), jnp.float32)             # fc1.bias
    return (w1, b1, p1, w2, b2, p2, wf, bf)


if __name__ == "__main__":
    root = jax.random.PRNGKey(0)
    kx, kp = jax.random.split(root)
    params = init_params(kp)
    x = jax.random.normal(kx, (B, C_IN, L_IN), jnp.float32)

    # Parameter packing happens once, off the per-call hot path.
    slab = jax.block_until_ready(pack_params(params))

    fwd = jax.jit(comparenet_forward)
    out = jax.block_until_ready(fwd(x, slab))

    ref = comparenet_reference(x, params)
    assert out.shape == (B, 1)
    assert jnp.allclose(out, ref, atol=1e-4, rtol=1e-4), (out, ref)

    print("KERNEL_OK")
</pallas_src>

<mosaic_0001>
module attributes {stable_mosaic.version = 11 : i64} {
  func.func @comparenet_kernel(%arg0: memref<2x2x32xf32, #tpu.memory_space<vmem>>, %arg1: memref<16x128xf32, #tpu.memory_space<vmem>>, %arg2: memref<2x1xf32, #tpu.memory_space<vmem>>) attributes {dimension_semantics = [], scalar_prefetch = 0 : i64, scratch_operands = 0 : i64, tpu.core_type = #tpu.core_type<tc>} {
    %c0 = arith.constant 0 : index
    %c0_0 = arith.constant 0 : index
    %0 = vector.load %arg1[%c0, %c0_0] : memref<16x128xf32, #tpu.memory_space<vmem>>, vector<16x128xf32>
    %c0_1 = arith.constant 0 : index
    %c0_2 = arith.constant 0 : index
    %c0_3 = arith.constant 0 : index
    %1 = vector.load %arg0[%c0_1, %c0_2, %c0_3] : memref<2x2x32xf32, #tpu.memory_space<vmem>>, vector<1x2x32xf32>
    %2 = vector.shape_cast %1 : vector<1x2x32xf32> to vector<2x32xf32>
    %c1 = arith.constant 1 : index
    %c0_4 = arith.constant 0 : index
    %c0_5 = arith.constant 0 : index
    %3 = vector.load %arg0[%c1, %c0_4, %c0_5] : memref<2x2x32xf32, #tpu.memory_space<vmem>>, vector<1x2x32xf32>
    %4 = vector.shape_cast %3 : vector<1x2x32xf32> to vector<2x32xf32>
    %5 = tpu.concatenate %2, %4 in 1 : vector<2x32xf32>, vector<2x32xf32> -> vector<2x64xf32>
    %6 = vector.extract_strided_slice %0 {offsets = [0, 0], sizes = [4, 20], strides = [1, 1]} : vector<16x128xf32> to vector<4x20xf32>
    %7 = vector.extract_strided_slice %0 {offsets = [0, 32], sizes = [4, 1], strides = [1, 1]} : vector<16x128xf32> to vector<4x1xf32>
    %8 = vector.extract_strided_slice %0 {offsets = [4, 0], sizes = [2, 20], strides = [1, 1]} : vector<16x128xf32> to vector<2x20xf32>
    %9 = vector.extract_strided_slice %0 {offsets = [4, 32], sizes = [2, 1], strides = [1, 1]} : vector<16x128xf32> to vector<2x1xf32>
    %10 = vector.extract_strided_slice %0 {offsets = [8, 0], sizes = [4, 19], strides = [1, 1]} : vector<16x128xf32> to vector<4x19xf32>
    %11 = vector.extract_strided_slice %0 {offsets = [8, 32], sizes = [1, 1], strides = [1, 1]} : vector<16x128xf32> to vector<1x1xf32>
    %12 = vector.extract_strided_slice %0 {offsets = [9, 32], sizes = [1, 1], strides = [1, 1]} : vector<16x128xf32> to vector<1x1xf32>
    %13 = vector.extract_strided_slice %0 {offsets = [10, 32], sizes = [1, 1], strides = [1, 1]} : vector<16x128xf32> to vector<1x1xf32>
    %14 = vector.extract_strided_slice %5 {offsets = [0, 0], sizes = [2, 55], strides = [1, 1]} : vector<2x64xf32> to vector<2x55xf32>
    %15 = vector.extract_strided_slice %5 {offsets = [0, 1], sizes = [2, 55], strides = [1, 1]} : vector<2x64xf32> to vector<2x55xf32>
    %16 = vector.extract_strided_slice %5 {offsets = [0, 2], sizes = [2, 55], strides = [1, 1]} : vector<2x64xf32> to vector<2x55xf32>
    %17 = vector.extract_strided_slice %5 {offsets = [0, 3], sizes = [2, 55], strides = [1, 1]} : vector<2x64xf32> to vector<2x55xf32>
    %18 = vector.extract_strided_slice %5 {offsets = [0, 4], sizes = [2, 55], strides = [1, 1]} : vector<2x64xf32> to vector<2x55xf32>
    %19 = vector.extract_strided_slice %5 {offsets = [0, 5], sizes = [2, 55], strides = [1, 1]} : vector<2x64xf32> to vector<2x55xf32>
    %20 = vector.extract_strided_slice %5 {offsets = [0, 6], sizes = [2, 55], strides = [1, 1]} : vector<2x64xf32> to vector<2x55xf32>
    %21 = vector.extract_strided_slice %5 {offsets = [0, 7], sizes = [2, 55], strides = [1, 1]} : vector<2x64xf32> to vector<2x55xf32>
    %22 = vector.extract_strided_slice %5 {offsets = [0, 8], sizes = [2, 55], strides = [1, 1]} : vector<2x64xf32> to vector<2x55xf32>
    %23 = vector.extract_strided_slice %5 {offsets = [0, 9], sizes = [2, 55], strides = [1, 1]} : vector<2x64xf32> to vector<2x55xf32>
    %24 = tpu.concatenate %14, %15, %16, %17, %18, %19, %20, %21, %22, %23 in 0 : vector<2x55xf32>, vector<2x55xf32>, vector<2x55xf32>, vector<2x55xf32>, vector<2x55xf32>, vector<2x55xf32>, vector<2x55xf32>, vector<2x55xf32>, vector<2x55xf32>, vector<2x55xf32> -> vector<20x55xf32>
    %cst = arith.constant dense<0.000000e+00> : vector<4x55xf32>
    %25 = tpu.matmul %6, %24, %cst {dimension_numbers = #tpu.dot_dimension_numbers<[1], [0], [0], [1], [0, 0, 1, 1], [], []>} : vector<4x20xf32>, vector<20x55xf32>, vector<4x55xf32> -> vector<4x55xf32>
    %26 = vector.broadcast %7 : vector<4x1xf32> to vector<4x55xf32>
    %27 = arith.addf %25, %26 : vector<4x55xf32>
    %cst_6 = arith.constant 0.000000e+00 : f32
    %28 = vector.broadcast %cst_6 : f32 to vector<4x55xf32>
    %29 = arith.cmpf oge, %27, %28 : vector<4x55xf32>
    %30 = vector.broadcast %11 : vector<1x1xf32> to vector<4x55xf32>
    %31 = arith.mulf %30, %27 : vector<4x55xf32>
    %32 = arith.select %29, %27, %31 : vector<4x55xi1>, vector<4x55xf32>
    %33 = vector.extract_strided_slice %32 {offsets = [0, 0], sizes = [4, 51], strides = [1, 1]} : vector<4x55xf32> to vector<4x51xf32>
    %34 = vector.extract_strided_slice %32 {offsets = [0, 1], sizes = [4, 51], strides = [1, 1]} : vector<4x55xf32> to vector<4x51xf32>
    %35 = vector.extract_strided_slice %32 {offsets = [0, 2], sizes = [4, 51], strides = [1, 1]} : vector<4x55xf32> to vector<4x51xf32>
    %36 = vector.extract_strided_slice %32 {offsets = [0, 3], sizes = [4, 51], strides = [1, 1]} : vector<4x55xf32> to vector<4x51xf32>
    %37 = vector.extract_strided_slice %32 {offsets = [0, 4], sizes = [4, 51], strides = [1, 1]} : vector<4x55xf32> to vector<4x51xf32>
    %38 = tpu.concatenate %33, %34, %35, %36, %37 in 0 : vector<4x51xf32>, vector<4x51xf32>, vector<4x51xf32>, vector<4x51xf32>, vector<4x51xf32> -> vector<20x51xf32>
    %cst_7 = arith.constant dense<0.000000e+00> : vector<2x51xf32>
    %39 = tpu.matmul %8, %38, %cst_7 {dimension_numbers = #tpu.dot_dimension_numbers<[1], [0], [0], [1], [0, 0, 1, 1], [], []>} : vector<2x20xf32>, vector<20x51xf32>, vector<2x51xf32> -> vector<2x51xf32>
    %40 = vector.broadcast %9 : vector<2x1xf32> to vector<2x51xf32>
    %41 = arith.addf %39, %40 : vector<2x51xf32>
    %cst_8 = arith.constant 0.000000e+00 : f32
    %42 = vector.broadcast %cst_8 : f32 to vector<2x51xf32>
    %43 = arith.cmpf oge, %41, %42 : vector<2x51xf32>
    %44 = vector.broadcast %12 : vector<1x1xf32> to vector<2x51xf32>
    %45 = arith.mulf %44, %41 : vector<2x51xf32>
    %46 = arith.select %43, %41, %45 : vector<2x51xi1>, vector<2x51xf32>
    %47 = vector.extract_strided_slice %46 {offsets = [0, 0], sizes = [1, 19], strides = [1, 1]} : vector<2x51xf32> to vector<1x19xf32>
    %48 = vector.extract_strided_slice %46 {offsets = [0, 32], sizes = [1, 19], strides = [1, 1]} : vector<2x51xf32> to vector<1x19xf32>
    %49 = vector.extract_strided_slice %46 {offsets = [1, 0], sizes = [1, 19], strides = [1, 1]} : vector<2x51xf32> to vector<1x19xf32>
    %50 = vector.extract_strided_slice %46 {offsets = [1, 32], sizes = [1, 19], strides = [1, 1]} : vector<2x51xf32> to vector<1x19xf32>
    %51 = tpu.concatenate %47, %48, %49, %50 in 0 : vector<1x19xf32>, vector<1x19xf32>, vector<1x19xf32>, vector<1x19xf32> -> vector<4x19xf32>
    %52 = arith.mulf %51, %10 : vector<4x19xf32>
    %cst_9 = arith.constant dense<0.000000e+00> : vector<4xf32>
    %53 = vector.multi_reduction <add>, %52, %cst_9 [1] : vector<4x19xf32> to vector<4xf32>
    %54 = vector.shape_cast %53 : vector<4xf32> to vector<4x1xf32>
    %55 = vector.extract_strided_slice %54 {offsets = [0, 0], sizes = [2, 1], strides = [1, 1]} : vector<4x1xf32> to vector<2x1xf32>
    %56 = vector.extract_strided_slice %54 {offsets = [2, 0], sizes = [2, 1], strides = [1, 1]} : vector<4x1xf32> to vector<2x1xf32>
    %57 = arith.addf %55, %56 : vector<2x1xf32>
    %58 = vector.broadcast %13 : vector<1x1xf32> to vector<2x1xf32>
    %59 = arith.addf %57, %58 : vector<2x1xf32>
    %60 = arith.negf %59 : vector<2x1xf32>
    %61 = math.exp %60 : vector<2x1xf32>
    %cst_10 = arith.constant 1.000000e+00 : f32
    %62 = vector.broadcast %cst_10 : f32 to vector<2x1xf32>
    %63 = arith.addf %62, %61 : vector<2x1xf32>
    %64 = arith.divf %62, %63 : vector<2x1xf32>
    %c0_11 = arith.constant 0 : index
    %c0_12 = arith.constant 0 : index
    %65 = vector.load %arg2[%c0_11, %c0_12] : memref<2x1xf32, #tpu.memory_space<vmem>>, vector<2x1xf32>
    tpu.vector_store %arg2[%c0_11, %c0_12], %64 {strides = array<i32>} : memref<2x1xf32, #tpu.memory_space<vmem>>, vector<2x1xf32>,
    return
  }
}

</mosaic_0001>

<llo_original>
// kernel: comparenet_forward.1
$region0: #{comparenet_forward.1}
  #allocation0 [shape = 'u32[]', space=smem, size = 0x4, offset = 0x4, fixed_abs, tag = 'smem constant byte address 0x4 - core index']
  #allocation1 [shape = 'u32[144,128]{1,0:T(1,128)}', space=vmem, size = 0x12000, scoped, tag = 'internal scratch']
  %s0 = inlined_call_operand.hbm [shape: f32[2,2,32], index: 0, kind: input, shape index: {}]
  %s1 = inlined_call_operand.hbm [shape: f32[16,128], index: 1, kind: input, shape index: {}]
  %s2 = inlined_call_operand.vmem [shape: f32[2,1], index: 2, kind: output, shape index: {}]
  %s3 = sld [smem:[#allocation0]]
  $region26: #{comparenet_forward.1} parent=0
    _
  %s5 = ssub.s32 1, %s3
  %s6 = scalar_select 0, %s5, %s3
  $region1: #{comparenet_forward.1} parent=0
    #allocation2 [shape = 'u8[2048]{0}', space=vmem, size = 0x800, scoped, tag = 'input window, operand 0, single buffered']
    #allocation3 [shape = 's32[1]{0}', space=sflag, size = 0x4, scoped, tag = 'scoped memory for comparenet_forward.1']
    #allocation4 [shape = 'u8[8192]{0}', space=vmem, size = 0x2000, scoped, tag = 'input window, operand 1, single buffered']
    #allocation5 [shape = 's32[1]{0}', space=sflag, size = 0x4, scoped, tag = 'scoped memory for comparenet_forward.1']
    %7 = vsyncpa [#allocation3], 0
    %8 = vsyncpa [#allocation5], 0
    // Predicated region
    $region2: #{comparenet_forward.1} parent=1 // pred_check
      _
    $region3: #{comparenet_forward.1} parent=1 // pred_check_branch
      %10 = sbr.rel (0) target = $region5
    $region4: #{comparenet_forward.1} parent=1 // pred_region
      %s12 = ssub.s32 64, 64
      %13 = vsyncadd [#allocation3], %s12
      %s14 = sshll.u32 [#allocation2], 4
      %s15 = int_to_ptr.vmem [resolvable:$true] %s14
      %20 = dma.hbm_to_vmem [thread:$0]  %s0, 64, %s15, [#allocation3], 32, 32, 2
    $region5: #{comparenet_forward.1} parent=1 // pred_fallthru
      _
    // Predicated region
    $region6: #{comparenet_forward.1} parent=1 // pred_check
      _
    $region7: #{comparenet_forward.1} parent=1 // pred_check_branch
      %22 = sbr.rel (0) target = $region9
    $region8: #{comparenet_forward.1} parent=1 // pred_region
      %s24 = ssub.s32 256, 256
      %25 = vsyncadd [#allocation5], %s24
      %s26 = sshll.u32 [#allocation4], 4
      %s27 = int_to_ptr.vmem [resolvable:$true] %s26
      %32 = dma.hbm_to_vmem [thread:$0]  %s1, 256, %s27, [#allocation5], 128, 128, 8
    $region9: #{comparenet_forward.1} parent=1 // pred_fallthru
      _
    // Predicated region
    $region10: #{comparenet_forward.1} parent=1 // pred_check
      _
    $region11: #{comparenet_forward.1} parent=1 // pred_check_branch
      %34 = sbr.rel (0) target = $region13
    $region12: #{comparenet_forward.1} parent=1 // pred_region
      %35 = dma.done [#allocation3], 64
    $region13: #{comparenet_forward.1} parent=1 // pred_fallthru
      _
    // Predicated region
    $region14: #{comparenet_forward.1} parent=1 // pred_check
      _
    $region15: #{comparenet_forward.1} parent=1 // pred_check_branch
      %37 = sbr.rel (0) target = $region17
    $region16: #{comparenet_forward.1} parent=1 // pred_region
      %38 = dma.done [#allocation5], 256
    $region17: #{comparenet_forward.1} parent=1 // pred_fallthru
      _
    %v39 = vld [vmem:[#allocation4] sm:$0xff]
    %v40 = vld [vmem:[#allocation4 + $0x8] sm:$0xff]
    %v41 = vld [vmem:[#allocation2] sm:$0x3]
    %s42 = scalar_lea.vmem [#allocation2], 2
    %v43 = vld [vmem:[%s42] sm:$0x3]
    %45 = vrot.lane.b32.xlu0 %v43, 32
    %v46 = vpop.permute.xlu0 %45
    %vm48 = vcmask 261120
    %v49 = vsel %vm48, %v41, %v46
    %v51 = vrot.slane %v49, 6
    %52 = vrot.lane.b32.xlu0 %v51, 127
    %v53 = vpop.permute.xlu0 %52
    %v55 = vrot.slane %v49, 4
    %56 = vrot.lane.b32.xlu0 %v55, 126
    %v57 = vpop.permute.xlu0 %56
    %v59 = vrot.slane %v49, 2
    %60 = vrot.lane.b32.xlu0 %v59, 125
    %v61 = vpop.permute.xlu0 %60
    %63 = vrot.lane.b32.xlu0 %v49, 124
    %v64 = vpop.permute.xlu0 %63
    %66 = vrot.lane.b32.xlu0 %v51, 123
    %v67 = vpop.permute.xlu0 %66
    %69 = vrot.lane.b32.xlu0 %v55, 122
    %v70 = vpop.permute.xlu0 %69
    %72 = vrot.lane.b32.xlu0 %v59, 121
    %v73 = vpop.permute.xlu0 %72
    %75 = vrot.lane.b32.xlu0 %v49, 120
    %v76 = vpop.permute.xlu0 %75
    %78 = vrot.lane.b32.xlu0 %v51, 119
    %v79 = vpop.permute.xlu0 %78
    %vm81 = vcmask 1041408
    %v82 = vsel %vm81, %v49, %v53
    %vm83 = vcmask 1043456
    %v84 = vsel %vm83, %v82, %v57
    %vm85 = vcmask 1045504
    %v86 = vsel %vm85, %v84, %v61
    %v87 = vsel %vm81, %v64, %v67
    %v88 = vsel %vm83, %v87, %v70
    %v89 = vsel %vm85, %v88, %v73
    %v90 = vsel %vm81, %v76, %v79
    %92 = vset.pattern.permute.xlu0 32
    %93 = vperm.xlu0 %92, %v39
    %v94 = vpop.permute.xlu0 %93
    %vm96 = vcmask 162816
    %v97 = vsel %vm96, %v39, 0
    %v100 = vsel %vm83, %v90, 0
    %102 = vmatprep.subr.mxu0 0.0
    %103 = vmatpush1.msra.mxu0 %v86
    %104 = vmatprep.subr.mxu0 0.0
    %105 = vmatpush1.msra.mxu0 %v89
    %106 = vmatprep.subr.mxu0 0.0
    %107 = vmatpush1.msra.mxu0 %v100
    %108 = vmatprep.subr.mxu0 0.0
    %109 = vmatpush1.msra.mxu0 0.0
    %110 = vmatprep.subr.mxu0 0.0
    %111 = vmatpush1.msra.mxu0 0.0
    %112 = vmatprep.subr.mxu0 0.0
    %113 = vmatpush1.msra.mxu0 0.0
    %114 = vmatprep.subr.mxu0 0.0
    %115 = vmatpush1.msra.mxu0 0.0
    %116 = vmatprep.subr.mxu0 0.0
    %117 = vmatpush1.msra.mxu0 0.0
    %118 = vmatprep.subr.mxu0 0.0
    %119 = vmatpush1.msra.mxu0 0.0
    %120 = vmatprep.subr.mxu0 0.0
    %121 = vmatpush1.msra.mxu0 0.0
    %122 = vmatprep.subr.mxu0 0.0
    %123 = vmatpush1.msra.mxu0 0.0
    %124 = vmatprep.subr.mxu0 0.0
    %125 = vmatpush1.msra.mxu0 0.0
    %126 = vmatprep.subr.mxu0 0.0
    %127 = vmatpush1.msra.mxu0 0.0
    %128 = vmatprep.subr.mxu0 0.0
    %129 = vmatpush1.msra.mxu0 0.0
    %130 = vmatprep.subr.mxu0 0.0
    %131 = vmatpush1.msra.mxu0 0.0
    %132 = vmatprep.subr.mxu0 0.0
    %133 = vmatpush1.msra.mxu0 0.0
    %134 = vmatprep.subr.mxu0 0.0
    %135 = vmatpush1.msra.mxu0 0.0
    %136 = vmatprep.subr.mxu0 0.0
    %137 = vmatpush1.msra.mxu0 0.0
    %138 = vmatprep.subr.mxu0 0.0
    %139 = vmatpush1.msra.mxu0 0.0
    %140 = vmatprep.subr.mxu0 0.0
    %141 = vmatpush1.msra.mxu0 0.0
    %142 = vmatprep.subr.mxu0 0.0
    %143 = vmatpush1.msra.mxu0 0.0
    %144 = vmatprep.subr.mxu0 0.0
    %145 = vmatpush1.msra.mxu0 0.0
    %146 = vmatprep.subr.mxu0 0.0
    %147 = vmatpush1.msra.mxu0 0.0
    %148 = vmatprep.subr.mxu0 0.0
    %149 = vmatpush1.msra.mxu0 0.0
    %150 = vmatprep.subr.mxu0 0.0
    %151 = vmatpush1.msra.mxu0 0.0
    %152 = vmatprep.subr.mxu0 0.0
    %153 = vmatpush1.msra.mxu0 0.0
    %154 = vmatprep.subr.mxu0 0.0
    %155 = vmatpush1.msra.mxu0 0.0
    %156 = vmatprep.subr.mxu0 0.0
    %157 = vmatpush1.msra.mxu0 0.0
    %158 = vmatprep.subr.mxu0 0.0
    %159 = vmatpush1.msra.mxu0 0.0
    %160 = vmatprep.subr.mxu0 0.0
    %161 = vmatpush1.msra.mxu0 0.0
    %162 = vmatprep.subr.mxu0 0.0
    %163 = vmatpush1.msra.mxu0 0.0
    %164 = vmatprep.subr.mxu0 0.0
    %165 = vmatpush1.msra.mxu0 0.0
    %166 = vmatprep.mubr.f32.mxu0 0.0
    %167 = vmatmul.mubr.f32.gmra.mrb[0].mxu0 %v97
    %v168 = vpop.f32.mrb[0].mxu0
    %v169 = vadd.f32 %v94, %v168
    %v170 = vpop.f32.mrb[0].mxu0
    %171 = vdwg.mxu0
    %vm172 = vcmp.ge.f32.partialorder %v169, 0.0
    %174 = vrot.lane.b32.xlu0 %v40, 96
    %v175 = vpop.permute.xlu0 %174
    %s176 = vtos %v175
    %v177 = vstv %s176
    %v179 = vmul.f32 %v177, %v169
    %v180 = vsel %vm172, %v169, %v179
    %v182 = vrot.slane %v180, 4
    %183 = vrot.lane.b32.xlu0 %v182, 127
    %v184 = vpop.permute.xlu0 %183
    %186 = vrot.lane.b32.xlu0 %v180, 126
    %v187 = vpop.permute.xlu0 %186
    %189 = vrot.lane.b32.xlu0 %v182, 125
    %v190 = vpop.permute.xlu0 %189
    %192 = vrot.lane.b32.xlu0 %v180, 124
    %v193 = vpop.permute.xlu0 %192
    %v194 = vsel %vm83, %v180, %v184
    %v195 = vsel %vm83, %v187, %v190
    %v196 = vrot.slane %v39, 4
    %v197 = vrot.slane %v94, 4
    %v199 = vsel %vm96, %v196, 0
    %v201 = vsel %vm83, %v193, 0
    %203 = vmatprep.subr.mxu0 0.0
    %204 = vmatpush1.msra.mxu0 %v194
    %205 = vmatprep.subr.mxu0 0.0
    %206 = vmatpush1.msra.mxu0 %v195
    %207 = vmatprep.subr.mxu0 0.0
    %208 = vmatpush1.msra.mxu0 %v201
    %209 = vmatprep.subr.mxu0 0.0
    %210 = vmatpush1.msra.mxu0 0.0
    %211 = vmatprep.subr.mxu0 0.0
    %212 = vmatpush1.msra.mxu0 0.0
    %213 = vmatprep.subr.mxu0 0.0
    %214 = vmatpush1.msra.mxu0 0.0
    %215 = vmatprep.subr.mxu0 0.0
    %216 = vmatpush1.msra.mxu0 0.0
    %217 = vmatprep.subr.mxu0 0.0
    %218 = vmatpush1.msra.mxu0 0.0
    %219 = vmatprep.subr.mxu0 0.0
    %220 = vmatpush1.msra.mxu0 0.0
    %221 = vmatprep.subr.mxu0 0.0
    %222 = vmatpush1.msra.mxu0 0.0
    %223 = vmatprep.subr.mxu0 0.0
    %224 = vmatpush1.msra.mxu0 0.0
    %225 = vmatprep.subr.mxu0 0.0
    %226 = vmatpush1.msra.mxu0 0.0
    %227 = vmatprep.subr.mxu0 0.0
    %228 = vmatpush1.msra.mxu0 0.0
    %229 = vmatprep.subr.mxu0 0.0
    %230 = vmatpush1.msra.mxu0 0.0
    %231 = vmatprep.subr.mxu0 0.0
    %232 = vmatpush1.msra.mxu0 0.0
    %233 = vmatprep.subr.mxu0 0.0
    %234 = vmatpush1.msra.mxu0 0.0
    %235 = vmatprep.subr.mxu0 0.0
    %236 = vmatpush1.msra.mxu0 0.0
    %237 = vmatprep.subr.mxu0 0.0
    %238 = vmatpush1.msra.mxu0 0.0
    %239 = vmatprep.subr.mxu0 0.0
    %240 = vmatpush1.msra.mxu0 0.0
    %241 = vmatprep.subr.mxu0 0.0
    %242 = vmatpush1.msra.mxu0 0.0
    %243 = vmatprep.subr.mxu0 0.0
    %244 = vmatpush1.msra.mxu0 0.0
    %245 = vmatprep.subr.mxu0 0.0
    %246 = vmatpush1.msra.mxu0 0.0
    %247 = vmatprep.subr.mxu0 0.0
    %248 = vmatpush1.msra.mxu0 0.0
    %249 = vmatprep.subr.mxu0 0.0
    %250 = vmatpush1.msra.mxu0 0.0
    %251 = vmatprep.subr.mxu0 0.0
    %252 = vmatpush1.msra.mxu0 0.0
    %253 = vmatprep.subr.mxu0 0.0
    %254 = vmatpush1.msra.mxu0 0.0
    %255 = vmatprep.subr.mxu0 0.0
    %256 = vmatpush1.msra.mxu0 0.0
    %257 = vmatprep.subr.mxu0 0.0
    %258 = vmatpush1.msra.mxu0 0.0
    %259 = vmatprep.subr.mxu0 0.0
    %260 = vmatpush1.msra.mxu0 0.0
    %261 = vmatprep.subr.mxu0 0.0
    %262 = vmatpush1.msra.mxu0 0.0
    %263 = vmatprep.subr.mxu0 0.0
    %264 = vmatpush1.msra.mxu0 0.0
    %265 = vmatprep.subr.mxu0 0.0
    %266 = vmatpush1.msra.mxu0 0.0
    %267 = vmatprep.mubr.f32.mxu0 0.0
    %268 = vmatmul.mubr.f32.gmra.mrb[0].mxu0 %v199
    %v269 = vpop.f32.mrb[0].mxu0
    %v270 = vadd.f32 %v197, %v269
    %v271 = vpop.f32.mrb[0].mxu0
    %272 = vdwg.mxu0
    %vm273 = vcmp.ge.f32.partialorder %v270, 0.0
    %v274 = vrot.slane %v40, 1
    %275 = vrot.lane.b32.xlu0 %v274, 96
    %v276 = vpop.permute.xlu0 %275
    %s277 = vtos %v276
    %v278 = vstv %s277
    %v280 = vmul.f32 %v278, %v270
    %v281 = vsel %vm273, %v270, %v280
    %v283 = vrot.slane %v281, 7
    %284 = vrot.lane.b32.xlu0 %v283, 96
    %v285 = vpop.permute.xlu0 %284
    %v288 = vrot.slane %v281, 6
    %289 = vrot.lane.b32.xlu0 %v288, 96
    %v290 = vpop.permute.xlu0 %289
    %vm292 = vcmask 1040384
    %v293 = vsel %vm292, %v281, %v285
    %v294 = vsel %vm81, %v293, %v283
    %vm295 = vcmask 1042432
    %v296 = vsel %vm295, %v294, %v290
    %v297 = vmul.f32 %v296, %v40
    %vm298 = vcmask 150528
    %v299 = vsel %vm298, %v297, 0.0
    %300 = vadd.xlane.f32.xlu0 %v299
    %v301 = vpop.xlane.xlu0 %300
    %v303 = vrot.slane %v301, 2
    %v305 = vadd.f32 %v301, %v303
    %v306 = vlaneseq
    %v307 = vshrl.u32 %v306, 7
    %v308 = vsub.s32 2, %v307
    %v309 = vrot.slane %v40, %v308
    %311 = vrot.lane.b32.xlu0 %v309, 96
    %v312 = vpop.permute.xlu0 %311
    %v314 = vadd.f32 %v305, %v312
    %v315 = vxor.u32 %v314, 2147483648
    %v316 = vmul.f32 %v315, 1.442695
    %v317 = vpow.pop %v316
    %v318 = vadd.f32 %v317, 1.0
    %v319 = vrcp.pop %v318
    %v320 = vmul.f32 1.0, %v319
    %vm321 = vcmask 1024
    %322 = vst.msk [vmem:[%s2] sm:$0x3] %vm321, %v320
    // Predicated region
    $region18: #{comparenet_forward.1} parent=1 // pred_check
      _
    $region19: #{comparenet_forward.1} parent=1 // pred_check_branch
      %324 = sbr.rel (0) target = $region21
    $region20: #{comparenet_forward.1} parent=1 // pred_region
      _
    $region21: #{comparenet_forward.1} parent=1 // pred_fallthru
      _
    // Predicated region
    $region22: #{comparenet_forward.1} parent=1 // pred_check
      _
    $region23: #{comparenet_forward.1} parent=1 // pred_check_branch
      %326 = sbr.rel (0) target = $region25
    $region24: #{comparenet_forward.1} parent=1 // pred_region
      _
    $region25: #{comparenet_forward.1} parent=1 // pred_fallthru
      _
    %327 = vsyncpa [#allocation3], 1
    %328 = vsyncpa [#allocation5], 1

</llo_original>
